<compile_context>
chip_gen: v7x
topology: tpu7x:2x2x1
jax: 0.10.0
libtpu: 0.0.40
codegen_flags: <defaults>
</compile_context>

<pallas_src>
import functools
import math

import jax
import jax.numpy as jnp
from jax import lax
from jax.experimental import pallas as pl
from jax.experimental.pallas import tpu as pltpu


# --------------------------- sizing helpers ----------------------------------
def _vmem_limit_bytes():
    """Per-generation scoped-VMEM budget (leave headroom below physical)."""
    cap = 64 * 1024 * 1024
    try:
        cap = int(pltpu.get_tpu_info().vmem_capacity_bytes)
    except Exception:
        pass
    # v7x (64 MiB physical) -> ~40 MiB scoped; v5e/v6e (128 MiB) -> 100 MiB.
    return max(32 * 1024 * 1024, min(cap - 24 * 1024 * 1024, 100 * 1024 * 1024))


def _choose_tile_f(f, nt, rows, itemsize, budget, max_tile_f):
    """Pick the F tile.  Prefer a single tile (teacher resident across the grid);
    otherwise the largest 128-multiple divisor of f that fits (no jnp.pad copy);
    padding is the last resort."""
    def nbytes(tf):
        # double-buffered student block + teacher block (conservative estimate)
        return 2 * (1 + nt) * rows * tf * itemsize

    if (max_tile_f is None or f <= max_tile_f) and nbytes(f) <= budget:
        return f, f
    cap = budget // (2 * (1 + nt) * rows * itemsize)
    if max_tile_f is not None:
        cap = min(cap, max_tile_f)
    cap = max(128, (cap // 128) * 128)
    t = cap
    while t >= 128:
        if f % t == 0:
            return t, f
        t -= 128
    tf = cap
    return tf, ((f + tf - 1) // tf) * tf


# ------------------------------- kernels --------------------------------------
def _pairs_kernel_single(x_ref, t_ref, ix_ref, iy_ref, o_ref, *, nt, n_rows):
    """Fast path, grid = (ns,), whole F in one tile.

    x_ref : (1, R, F)   current student chunk (R = B * r packed rows)
    t_ref : (Nt, R, F)  ALL teacher chunks (constant index_map -> VMEM resident)
    ix_ref: (1, R, 1)   inverse student row norms (replicated over packed rows)
    iy_ref: (Nt, R, 1)  inverse teacher row norms
    o_ref : (1, Nt, 1, 128) lanes [0,1,2] = [sum d^2, sum smooth_l1, sum(1-cos)]
    """
    x = x_ref[0].astype(jnp.float32)                      # (R, F)
    ix = ix_ref[0]                                        # (R, 1)
    lane = lax.broadcasted_iota(jnp.int32, (1, 128), 1)
    for j in range(nt):                                   # static unroll
        y = t_ref[j].astype(jnp.float32)                  # (R, F)
        d = x - y
        d2 = d * d
        ad = jnp.abs(d)
        sl1 = jnp.where(ad < 1.0, 0.5 * d2, ad - 0.5)     # SmoothL1, beta = 1
        xy = jnp.sum(x * y, axis=1, keepdims=True)        # (R, 1)
        d2_sum = jnp.sum(d2)
        sl1_sum = jnp.sum(sl1)
        cos_sum = jnp.sum(xy * ix * iy_ref[j])            # sum_b cos_b
        one_m_cos = jnp.float32(n_rows) - cos_sum
        o_ref[0, j] = (jnp.where(lane == 0, d2_sum, 0.0)
                       + jnp.where(lane == 1, sl1_sum, 0.0)
                       + jnp.where(lane == 2, one_m_cos, 0.0))


def _pairs_kernel_tiled(x_ref, t_ref, ix_ref, iy_ref, o_ref,
                        d2_acc, sl1_acc, xy_acc, *, nt, n_rows):
    """Fallback for huge F, grid = (ns, n_f), F axis innermost ('arbitrary')."""
    k = pl.program_id(1)
    nk = pl.num_programs(1)

    @pl.when(k == 0)
    def _():
        d2_acc[...] = jnp.zeros_like(d2_acc)
        sl1_acc[...] = jnp.zeros_like(sl1_acc)
        xy_acc[...] = jnp.zeros_like(xy_acc)

    x = x_ref[0].astype(jnp.float32)                      # (R, TF)
    for j in range(nt):
        y = t_ref[j].astype(jnp.float32)
        d = x - y
        d2 = d * d
        ad = jnp.abs(d)
        sl1 = jnp.where(ad < 1.0, 0.5 * d2, ad - 0.5)
        d2_acc[j] += jnp.sum(d2, axis=1, keepdims=True)   # (R, 1)
        sl1_acc[j] += jnp.sum(sl1, axis=1, keepdims=True)
        xy_acc[j] += jnp.sum(x * y, axis=1, keepdims=True)

    @pl.when(k == nk - 1)
    def _():
        ix = ix_ref[0]                                    # (R, 1)
        lane = lax.broadcasted_iota(jnp.int32, (1, 128), 1)
        for j in range(nt):
            d2_sum = jnp.sum(d2_acc[j])
            sl1_sum = jnp.sum(sl1_acc[j])
            cos_sum = jnp.sum(xy_acc[j] * ix * iy_ref[j])
            one_m_cos = jnp.float32(n_rows) - cos_sum
            o_ref[0, j] = (jnp.where(lane == 0, d2_sum, 0.0)
                           + jnp.where(lane == 1, sl1_sum, 0.0)
                           + jnp.where(lane == 2, one_m_cos, 0.0))


# ------------------------------- wrapper ---------------------------------------
def _pair_losses(s_chunks, t_chunks, s_offset, *, max_tile_f=None):
    """All-pairs partial sums.

    s_chunks : (Ns, B, F)  student chunks (pairs use chunks s_offset .. Ns-1)
    t_chunks : (Nt, B, F)  teacher chunks
    Returns  : (Ns - s_offset, Nt, 3) f32
               [:, :, 0] = sum((s - t)^2)
               [:, :, 1] = sum(smooth_l1(s - t))          (beta = 1)
               [:, :, 2] = sum_rows(1 - cos(s_row, t_row))
    """
    Ns, B, F = s_chunks.shape
    Nt = t_chunks.shape[0]
    ns = Ns - s_offset
    assert ns > 0 and Nt > 0

    # Per-chunk inverse row norms, computed ONCE (not per pair), in f32.
    eps2 = jnp.float32(1e-24)                 # F.normalize eps=1e-12, squared
    xx = jnp.sum(jnp.square(s_chunks.astype(jnp.float32)), axis=-1)  # (Ns, B)
    yy = jnp.sum(jnp.square(t_chunks.astype(jnp.float32)), axis=-1)  # (Nt, B)
    inv_x = lax.rsqrt(jnp.maximum(xx, eps2))
    inv_y = lax.rsqrt(jnp.maximum(yy, eps2))

    # Sublane packing: (B, F) -> (B*r, F//r) so vregs are filled when B < 8.
    r = 1
    if B < 8:
        for cand in range(min(8 // B, 8), 1, -1):
            if F % (cand * 128) == 0:
                r = cand
                break
    R = B * r
    Fr = F // r
    s_r = s_chunks.reshape(Ns, R, Fr)
    t_r = t_chunks.reshape(Nt, R, Fr)
    inv_x_r = jnp.repeat(inv_x, r, axis=1).reshape(Ns, R, 1)
    inv_y_r = jnp.repeat(inv_y, r, axis=1).reshape(Nt, R, 1)

    # VMEM-budget-driven F tile (prefer n_f == 1 so the teacher stays resident).
    vmem_limit = _vmem_limit_bytes()
    itemsize = jnp.dtype(s_chunks.dtype).itemsize
    tile_f, f_pad = _choose_tile_f(Fr, Nt, R, itemsize,
                                   int(vmem_limit * 0.7), max_tile_f)
    if f_pad != Fr:  # rare fallback; zero padding is exact for all three sums
        pad_cfg = [(0, 0), (0, 0), (0, f_pad - Fr)]
        s_r = jnp.pad(s_r, pad_cfg)
        t_r = jnp.pad(t_r, pad_cfg)
    n_f = f_pad // tile_f

    out_shape = jax.ShapeDtypeStruct((ns, Nt, 1, 128), jnp.float32)

    if n_f == 1:
        kernel = functools.partial(_pairs_kernel_single, nt=Nt, n_rows=B)
        out = pl.pallas_call(
            kernel,
            out_shape=out_shape,
            grid=(ns,),
            in_specs=[
                pl.BlockSpec((1, R, tile_f), lambda i: (i + s_offset, 0, 0)),
                pl.BlockSpec((Nt, R, tile_f), lambda i: (0, 0, 0)),   # resident
                pl.BlockSpec((1, R, 1), lambda i: (i + s_offset, 0, 0)),
                pl.BlockSpec((Nt, R, 1), lambda i: (0, 0, 0)),        # resident
            ],
            out_specs=pl.BlockSpec((1, Nt, 1, 128), lambda i: (i, 0, 0, 0)),
            compiler_params=pltpu.CompilerParams(
                dimension_semantics=("parallel",),
                vmem_limit_bytes=vmem_limit),
        )(s_r, t_r, inv_x_r, inv_y_r)
    else:
        kernel = functools.partial(_pairs_kernel_tiled, nt=Nt, n_rows=B)
        out = pl.pallas_call(
            kernel,
            out_shape=out_shape,
            grid=(ns, n_f),
            in_specs=[
                pl.BlockSpec((1, R, tile_f), lambda i, k: (i + s_offset, 0, k)),
                pl.BlockSpec((Nt, R, tile_f), lambda i, k: (0, 0, k)),
                pl.BlockSpec((1, R, 1), lambda i, k: (i + s_offset, 0, 0)),
                pl.BlockSpec((Nt, R, 1), lambda i, k: (0, 0, 0)),
            ],
            out_specs=pl.BlockSpec((1, Nt, 1, 128), lambda i, k: (i, 0, 0, 0)),
            scratch_shapes=[pltpu.VMEM((Nt, R, 1), jnp.float32)
                            for _ in range(3)],
            compiler_params=pltpu.CompilerParams(
                dimension_semantics=("parallel", "arbitrary"),
                vmem_limit_bytes=vmem_limit),
        )(s_r, t_r, inv_x_r, inv_y_r)

    return out[:, :, 0, :3]


def theia_loss(s_feats, s_feats_patch, t_feats, t_feats_patch, nimages, ncrops,
               *, max_tile_f=None):
    """JAX/Pallas equivalent of TheiaLoss.forward.

    s_feats:        (ncrops * B, Df...)
    s_feats_patch:  (nimages * Bp, Fp...)
    t_feats:        ((ncrops - nimages) * B, Df...)
    t_feats_patch:  (Bp, Fp...)
    """
    B = s_feats.shape[0] // ncrops
    Bp = t_feats_patch.shape[0]
    assert s_feats_patch.shape[0] == nimages * Bp
    assert Bp == B  # TheiaLoss contract (shared cos target length)
    Df = math.prod(s_feats.shape[1:])
    Fp = math.prod(t_feats_patch.shape[1:])

    # --- loop 1: each s_feats_patch chunk vs the (single) t_feats_patch -------
    sp = s_feats_patch.reshape(nimages, Bp, Fp)
    tp = t_feats_patch.reshape(1, Bp, Fp)
    patch = _pair_losses(sp, tp, 0, max_tile_f=max_tile_f)   # (nimages, 1, 3)
    p_sum = jnp.sum(patch, axis=(0, 1))

    # --- loop 2: s chunks with index >= 2 vs every t_feats chunk --------------
    nt = ncrops - nimages
    ns = ncrops - 2
    if ns > 0 and nt > 0:
        sr = s_feats.reshape(ncrops, B, Df)
        tr = t_feats.reshape(nt, B, Df)
        crop = _pair_losses(sr, tr, 2, max_tile_f=max_tile_f)  # (ns, nt, 3)
        c_sum = jnp.sum(crop, axis=(0, 1))
        n_crop_pairs = ns * nt
    else:
        c_sum = jnp.zeros((3,), jnp.float32)
        n_crop_pairs = 0

    n_loss = nimages + n_crop_pairs
    mse = (p_sum[0] / (Bp * Fp) + c_sum[0] / (B * Df)) / n_loss
    l1 = (p_sum[1] / (Bp * Fp) + c_sum[1] / (B * Df)) / n_loss
    cos = (p_sum[2] / Bp + c_sum[2] / B) / n_loss
    return {"mse_loss": mse, "cos_loss": cos, "l1_loss": l1}


# ----------------------------- pure-JAX reference -----------------------------
def _smooth_l1_ref(a, b):
    d = a - b
    ad = jnp.abs(d)
    return jnp.mean(jnp.where(ad < 1.0, 0.5 * d * d, ad - 0.5))


def _cos_loss_ref(a, b):
    a = a.reshape(a.shape[0], -1)
    b = b.reshape(b.shape[0], -1)
    eps = 1e-12
    an = a / jnp.maximum(jnp.linalg.norm(a, axis=1, keepdims=True), eps)
    bn = b / jnp.maximum(jnp.linalg.norm(b, axis=1, keepdims=True), eps)
    cos = jnp.sum(an * bn, axis=1) / jnp.sqrt(
        (jnp.sum(an * an, axis=1) + eps) * (jnp.sum(bn * bn, axis=1) + eps))
    return jnp.mean(1.0 - cos)


def theia_loss_ref(s_feats, s_feats_patch, t_feats, t_feats_patch, nimages, ncrops):
    s_chunks = jnp.split(s_feats, ncrops, axis=0)
    sp_chunks = jnp.split(s_feats_patch, nimages, axis=0)
    t_chunks = jnp.split(t_feats, ncrops - nimages, axis=0)
    mse = l1 = cos = 0.0
    n = 0
    for sp in sp_chunks:
        mse += jnp.mean((sp - t_feats_patch) ** 2)
        l1 += _smooth_l1_ref(sp, t_feats_patch)
        cos += _cos_loss_ref(sp, t_feats_patch)
        n += 1
    for i, s in enumerate(s_chunks):
        if i < 2:
            continue
        for t in t_chunks:
            mse += jnp.mean((s - t) ** 2)
            l1 += _smooth_l1_ref(s, t)
            cos += _cos_loss_ref(s, t)
            n += 1
    return {"mse_loss": mse / n, "cos_loss": cos / n, "l1_loss": l1 / n}


if __name__ == "__main__":
    key = jax.random.PRNGKey(0)
    ncrops, nimages = 4, 2
    B, Df = 2, 1024        # per-crop batch, flat crop-feature dim
    P, Dp = 8, 16          # patches, patch-feature dim (Fp = P*Dp = 128)

    k1, k2, k3, k4 = jax.random.split(key, 4)
    s_feats = jax.random.normal(k1, (ncrops * B, Df), jnp.float32)
    s_feats_patch = jax.random.normal(k2, (nimages * B, P, Dp), jnp.float32)
    t_feats = jax.random.normal(k3, ((ncrops - nimages) * B, Df), jnp.float32)
    t_feats_patch = jax.random.normal(k4, (B, P, Dp), jnp.float32)

    ref = theia_loss_ref(s_feats, s_feats_patch, t_feats, t_feats_patch,
                         nimages, ncrops)

    # Fast path: single F tile, teacher resident across the student grid axis.
    out = theia_loss(s_feats, s_feats_patch, t_feats, t_feats_patch,
                     nimages, ncrops)
    out = jax.tree_util.tree_map(jax.block_until_ready, out)

    # Forced F-tiling exercises the accumulator (tiled) kernel path as well.
    out_tiled = theia_loss(s_feats, s_feats_patch, t_feats, t_feats_patch,
                           nimages, ncrops, max_tile_f=128)
    out_tiled = jax.tree_util.tree_map(jax.block_until_ready, out_tiled)

    for name in ("mse_loss", "cos_loss", "l1_loss"):
        for got in (out[name], out_tiled[name]):
            assert abs(float(got) - float(ref[name])) < 2e-4, (
                name, float(got), float(ref[name]))

    print("KERNEL_OK")
</pallas_src>

<mosaic_0001>
module attributes {stable_mosaic.version = 11 : i64} {
  func.func @_pairs_kernel_single(%arg0: i32, %arg1: memref<1x2x128xf32, #tpu.memory_space<vmem>>, %arg2: memref<1x2x128xf32, #tpu.memory_space<vmem>>, %arg3: memref<1x2x1xf32, #tpu.memory_space<vmem>>, %arg4: memref<1x2x1xf32, #tpu.memory_space<vmem>>, %arg5: memref<1x1x1x128xf32, #tpu.memory_space<vmem>>) attributes {dimension_semantics = [#tpu.dimension_semantics<parallel>], iteration_bounds = array<i64: 2>, scalar_prefetch = 0 : i64, scratch_operands = 0 : i64, tpu.core_type = #tpu.core_type<tc>, window_params = [{transform_indices = @transform_0, window_bounds = array<i64: 1, 2, 128>}, {pipeline_mode = #tpu.pipeline_mode<synchronous>, transform_indices = @transform_1, window_bounds = array<i64: 1, 2, 128>}, {transform_indices = @transform_2, window_bounds = array<i64: 1, 2, 1>}, {pipeline_mode = #tpu.pipeline_mode<synchronous>, transform_indices = @transform_3, window_bounds = array<i64: 1, 2, 1>}, {transform_indices = @transform_4, window_bounds = array<i64: 1, 1, 1, 128>}]} {
    %c0 = arith.constant 0 : index
    %c0_0 = arith.constant 0 : index
    %c0_1 = arith.constant 0 : index
    %0 = vector.load %arg1[%c0, %c0_0, %c0_1] : memref<1x2x128xf32, #tpu.memory_space<vmem>>, vector<1x2x128xf32>
    %1 = vector.shape_cast %0 : vector<1x2x128xf32> to vector<2x128xf32>
    %c0_2 = arith.constant 0 : index
    %c0_3 = arith.constant 0 : index
    %c0_4 = arith.constant 0 : index
    %2 = vector.load %arg3[%c0_2, %c0_3, %c0_4] : memref<1x2x1xf32, #tpu.memory_space<vmem>>, vector<1x2x1xf32>
    %3 = vector.shape_cast %2 : vector<1x2x1xf32> to vector<2x1xf32>
    %4 = tpu.iota {dimensions = array<i32: 1>} : vector<1x128xi32>
    %c0_5 = arith.constant 0 : index
    %c0_6 = arith.constant 0 : index
    %c0_7 = arith.constant 0 : index
    %5 = vector.load %arg2[%c0_5, %c0_6, %c0_7] : memref<1x2x128xf32, #tpu.memory_space<vmem>>, vector<1x2x128xf32>
    %6 = vector.shape_cast %5 : vector<1x2x128xf32> to vector<2x128xf32>
    %7 = arith.subf %1, %6 : vector<2x128xf32>
    %8 = arith.mulf %7, %7 : vector<2x128xf32>
    %9 = math.absf %7 : vector<2x128xf32>
    %cst = arith.constant 1.000000e+00 : f32
    %10 = vector.broadcast %cst : f32 to vector<2x128xf32>
    %11 = arith.cmpf olt, %9, %10 : vector<2x128xf32>
    %cst_8 = arith.constant 5.000000e-01 : f32
    %12 = vector.broadcast %cst_8 : f32 to vector<2x128xf32>
    %13 = arith.mulf %12, %8 : vector<2x128xf32>
    %cst_9 = arith.constant 5.000000e-01 : f32
    %14 = vector.broadcast %cst_9 : f32 to vector<2x128xf32>
    %15 = arith.subf %9, %14 : vector<2x128xf32>
    %16 = arith.select %11, %13, %15 : vector<2x128xi1>, vector<2x128xf32>
    %17 = arith.mulf %1, %6 : vector<2x128xf32>
    %cst_10 = arith.constant dense<0.000000e+00> : vector<2xf32>
    %18 = vector.multi_reduction <add>, %17, %cst_10 [1] : vector<2x128xf32> to vector<2xf32>
    %19 = vector.shape_cast %18 : vector<2xf32> to vector<2x1xf32>
    %20 = vector.shape_cast %8 : vector<2x128xf32> to vector<1x2x128xf32>
    %cst_11 = arith.constant dense<0.000000e+00> : vector<1xf32>
    %21 = vector.multi_reduction <add>, %20, %cst_11 [1, 2] : vector<1x2x128xf32> to vector<1xf32>
    %22 = vector.shape_cast %21 : vector<1xf32> to vector<1x1x1xf32>
    %23 = vector.extract %22[0, 0, 0] : f32 from vector<1x1x1xf32>
    %24 = vector.shape_cast %16 : vector<2x128xf32> to vector<1x2x128xf32>
    %cst_12 = arith.constant dense<0.000000e+00> : vector<1xf32>
    %25 = vector.multi_reduction <add>, %24, %cst_12 [1, 2] : vector<1x2x128xf32> to vector<1xf32>
    %26 = vector.shape_cast %25 : vector<1xf32> to vector<1x1x1xf32>
    %27 = vector.extract %26[0, 0, 0] : f32 from vector<1x1x1xf32>
    %28 = arith.mulf %19, %3 : vector<2x1xf32>
    %c0_13 = arith.constant 0 : index
    %c0_14 = arith.constant 0 : index
    %c0_15 = arith.constant 0 : index
    %29 = vector.load %arg4[%c0_13, %c0_14, %c0_15] : memref<1x2x1xf32, #tpu.memory_space<vmem>>, vector<1x2x1xf32>
    %30 = vector.shape_cast %29 : vector<1x2x1xf32> to vector<2x1xf32>
    %31 = arith.mulf %28, %30 : vector<2x1xf32>
    %32 = vector.shape_cast %31 : vector<2x1xf32> to vector<1x2x1xf32>
    %cst_16 = arith.constant dense<0.000000e+00> : vector<1xf32>
    %33 = vector.multi_reduction <add>, %32, %cst_16 [1, 2] : vector<1x2x1xf32> to vector<1xf32>
    %34 = vector.shape_cast %33 : vector<1xf32> to vector<1x1x1xf32>
    %35 = vector.extract %34[0, 0, 0] : f32 from vector<1x1x1xf32>
    %cst_17 = arith.constant 2.000000e+00 : f32
    %36 = arith.subf %cst_17, %35 : f32
    %c0_i32 = arith.constant 0 : i32
    %37 = vector.broadcast %c0_i32 : i32 to vector<1x128xi32>
    %38 = arith.cmpi eq, %4, %37 : vector<1x128xi32>
    %cst_18 = arith.constant 0.000000e+00 : f32
    %39 = vector.broadcast %23 : f32 to vector<1x128xf32>
    %40 = vector.broadcast %cst_18 : f32 to vector<1x128xf32>
    %41 = arith.select %38, %39, %40 : vector<1x128xi1>, vector<1x128xf32>
    %c1_i32 = arith.constant 1 : i32
    %42 = vector.broadcast %c1_i32 : i32 to vector<1x128xi32>
    %43 = arith.cmpi eq, %4, %42 : vector<1x128xi32>
    %cst_19 = arith.constant 0.000000e+00 : f32
    %44 = vector.broadcast %27 : f32 to vector<1x128xf32>
    %45 = vector.broadcast %cst_19 : f32 to vector<1x128xf32>
    %46 = arith.select %43, %44, %45 : vector<1x128xi1>, vector<1x128xf32>
    %47 = arith.addf %41, %46 : vector<1x128xf32>
    %c2_i32 = arith.constant 2 : i32
    %48 = vector.broadcast %c2_i32 : i32 to vector<1x128xi32>
    %49 = arith.cmpi eq, %4, %48 : vector<1x128xi32>
    %cst_20 = arith.constant 0.000000e+00 : f32
    %50 = vector.broadcast %36 : f32 to vector<1x128xf32>
    %51 = vector.broadcast %cst_20 : f32 to vector<1x128xf32>
    %52 = arith.select %49, %50, %51 : vector<1x128xi1>, vector<1x128xf32>
    %53 = arith.addf %47, %52 : vector<1x128xf32>
    %c0_21 = arith.constant 0 : index
    %c0_22 = arith.constant 0 : index
    %c0_23 = arith.constant 0 : index
    %c0_24 = arith.constant 0 : index
    %54 = vector.load %arg5[%c0_21, %c0_22, %c0_23, %c0_24] : memref<1x1x1x128xf32, #tpu.memory_space<vmem>>, vector<1x1x1x128xf32>
    %55 = vector.shape_cast %54 : vector<1x1x1x128xf32> to vector<1x128xf32>
    %56 = vector.shape_cast %53 : vector<1x128xf32> to vector<1x1x1x128xf32>
    tpu.vector_store %arg5[%c0_21, %c0_22, %c0_23, %c0_24], %56 {strides = array<i32>} : memref<1x1x1x128xf32, #tpu.memory_space<vmem>>, vector<1x1x1x128xf32>,
    return
  }
  func.func @transform_0(%arg0: i32) -> (i32, i32, i32) {
    %c0_i32 = arith.constant 0 : i32
    %0 = arith.addi %arg0, %c0_i32 : i32
    %c0_i32_0 = arith.constant 0 : i32
    %c0_i32_1 = arith.constant 0 : i32
    %c0_i32_2 = arith.constant 0 : i32
    return %0, %c0_i32_0, %c0_i32_1 : i32, i32, i32
  }
  func.func @transform_1(%arg0: i32) -> (i32, i32, i32) {
    %c0_i32 = arith.constant 0 : i32
    %c0_i32_0 = arith.constant 0 : i32
    %c0_i32_1 = arith.constant 0 : i32
    %c0_i32_2 = arith.constant 0 : i32
    return %c0_i32, %c0_i32_0, %c0_i32_1 : i32, i32, i32
  }
  func.func @transform_2(%arg0: i32) -> (i32, i32, i32) {
    %c0_i32 = arith.constant 0 : i32
    %0 = arith.addi %arg0, %c0_i32 : i32
    %c0_i32_0 = arith.constant 0 : i32
    %c0_i32_1 = arith.constant 0 : i32
    %c0_i32_2 = arith.constant 0 : i32
    return %0, %c0_i32_0, %c0_i32_1 : i32, i32, i32
  }
  func.func @transform_3(%arg0: i32) -> (i32, i32, i32) {
    %c0_i32 = arith.constant 0 : i32
    %c0_i32_0 = arith.constant 0 : i32
    %c0_i32_1 = arith.constant 0 : i32
    %c0_i32_2 = arith.constant 0 : i32
    return %c0_i32, %c0_i32_0, %c0_i32_1 : i32, i32, i32
  }
  func.func @transform_4(%arg0: i32) -> (i32, i32, i32, i32) {
    %c0_i32 = arith.constant 0 : i32
    %c0_i32_0 = arith.constant 0 : i32
    %c0_i32_1 = arith.constant 0 : i32
    %c0_i32_2 = arith.constant 0 : i32
    return %arg0, %c0_i32, %c0_i32_0, %c0_i32_1 : i32, i32, i32, i32
  }
}

</mosaic_0001>

<llo_original>
// kernel: tpu_custom_call.1
$region0: #{tpu_custom_call.1}
  #allocation0 [shape = 'u32[]', space=smem, size = 0x4, offset = 0x4, fixed_abs, tag = 'smem constant byte address 0x4 - core index']
  #allocation1 [shape = 'u32[144,128]{1,0:T(1,128)}', space=vmem, size = 0x12000, scoped, tag = 'internal scratch']
  %s0 = inlined_call_operand.vmem [shape: f32[2,2,128], index: 0, kind: input, shape index: {}]
  %s1 = inlined_call_operand.vmem [shape: f32[1,2,128], index: 1, kind: input, shape index: {}]
  %s2 = inlined_call_operand.vmem [shape: f32[2,2,1], index: 2, kind: input, shape index: {}]
  %s3 = inlined_call_operand.vmem [shape: f32[1,2,1], index: 3, kind: input, shape index: {}]
  %s4 = inlined_call_operand.hbm [shape: f32[2,1,1,128], index: 4, kind: output, shape index: {}]
  %s5 = sld [smem:[#allocation0]]
  $region49: #{tpu_custom_call.1} parent=0
    _
  %s7 = ssub.s32 1, %s5
  %s8 = scalar_select 0, %s7, %s5
  $region1: #{tpu_custom_call.1} parent=0
    #allocation2 [shape = 'u8[1024]{0}', space=vmem, size = 0x400, scoped, tag = 'output window, operand 0']
    #allocation3 [shape = 's32[2]{0}', space=sflag, size = 0x8, scoped, tag = 'scoped memory for tpu_custom_call.1']
    %9 = vsyncpa [#allocation3], 0
    %s10 = scalar_lea.sflag [#allocation3], 1
    %11 = vsyncpa %s10, 0
    loop: start=0, step=1, limit=4
    $region2: #{tpu_custom_call.1} parent=1 // loop_pre_header
      _
    $region3: #{tpu_custom_call.1} parent=1 // loop_header
      %s13 = sphi 0, %s17
      %p14 = scmp.ge.s32.totalorder %s13, 4
      %s23 = sphi 0, %s25
      %s26 = sphi 0, %s23
      %s27 = sphi 0, %s26
      %s43 = sphi 0, %s27
      %s47 = sphi 0, %s47
      %s49 = sphi 0, %s47
      %s50 = sphi 0, %s49
      %s64 = sphi 0, %s50
      %s70 = sphi 0, %s72
      %s73 = sphi 0, %s70
      %s74 = sphi 0, %s73
      %s90 = sphi 0, %s74
      %s94 = sphi 0, %s94
      %s96 = sphi 0, %s94
      %s97 = sphi 0, %s96
      %s111 = sphi 0, %s97
      %s117 = sphi 0, %s119
      %s120 = sphi 0, %s117
      %s121 = sphi 0, %s120
      %s137 = sphi 0, %s121
    $region4: #{tpu_custom_call.1} parent=1 // loop_header_branch
      %16 = sbr.rel (%p14) target = $region8
    $region5: #{tpu_custom_call.1} parent=1 // loop_body
      %s18 = ssub.s32 %s13, 1
      %s19 = ssub.s32 %s13, 2
      %s20 = sadd.s32 %s13, 1
      %s21 = ssub.s32 %s13, %s20
      %p22 = scmp.eq.s32.totalorder %s21, 0
      %s24 = sadd.s32 %s23, 1
      %s25 = scalar_select %p22, %s23, %s24
      %p28 = pneg %p22
      %p29 = scmp.eq.s32.totalorder %s13, 1
      %p30 = por %p28, %p29
      %p31 = scmp.ne.s32.totalorder %s23, %s26
      %p32 = scmp.eq.s32.totalorder %s13, 0
      %p33 = por %p31, %p32
      %p34 = scmp.ne.s32.totalorder %s23, %s26
      %p35 = scmp.eq.s32.totalorder %s18, 1
      %p36 = por %p34, %p35
      %p37 = scmp.ne.s32.totalorder %s26, %s27
      %p38 = scmp.eq.s32.totalorder %s18, 0
      %p39 = por %p37, %p38
      %p40 = scmp.ne.s32.totalorder %s26, %s27
      %p41 = scmp.eq.s32.totalorder %s19, 1
      %p42 = por %p40, %p41
      %p44 = scmp.ne.s32.totalorder %s27, %s43
      %p45 = scmp.eq.s32.totalorder %s19, 0
      %p46 = por %p44, %p45
      %s48 = sadd.s32 %s47, 1
      %p51 = scmp.eq.s32.totalorder %s13, 1
      %p52 = scmp.ne.s32.totalorder %s47, %s49
      %p53 = scmp.eq.s32.totalorder %s13, 0
      %p54 = por %p52, %p53
      %p55 = scmp.ne.s32.totalorder %s47, %s49
      %p56 = scmp.eq.s32.totalorder %s18, 1
      %p57 = por %p55, %p56
      %p58 = scmp.ne.s32.totalorder %s49, %s50
      %p59 = scmp.eq.s32.totalorder %s18, 0
      %p60 = por %p58, %p59
      %p61 = scmp.ne.s32.totalorder %s49, %s50
      %p62 = scmp.eq.s32.totalorder %s19, 1
      %p63 = por %p61, %p62
      %p65 = scmp.ne.s32.totalorder %s50, %s64
      %p66 = scmp.eq.s32.totalorder %s19, 0
      %p67 = por %p65, %p66
      %s68 = ssub.s32 %s13, %s20
      %p69 = scmp.eq.s32.totalorder %s68, 0
      %s71 = sadd.s32 %s70, 1
      %s72 = scalar_select %p69, %s70, %s71
      %p75 = pneg %p69
      %p76 = scmp.eq.s32.totalorder %s13, 1
      %p77 = por %p75, %p76
      %p78 = scmp.ne.s32.totalorder %s70, %s73
      %p79 = scmp.eq.s32.totalorder %s13, 0
      %p80 = por %p78, %p79
      %p81 = scmp.ne.s32.totalorder %s70, %s73
      %p82 = scmp.eq.s32.totalorder %s18, 1
      %p83 = por %p81, %p82
      %p84 = scmp.ne.s32.totalorder %s73, %s74
      %p85 = scmp.eq.s32.totalorder %s18, 0
      %p86 = por %p84, %p85
      %p87 = scmp.ne.s32.totalorder %s73, %s74
      %p88 = scmp.eq.s32.totalorder %s19, 1
      %p89 = por %p87, %p88
      %p91 = scmp.ne.s32.totalorder %s74, %s90
      %p92 = scmp.eq.s32.totalorder %s19, 0
      %p93 = por %p91, %p92
      %s95 = sadd.s32 %s94, 1
      %p98 = scmp.eq.s32.totalorder %s13, 1
      %p99 = scmp.ne.s32.totalorder %s94, %s96
      %p100 = scmp.eq.s32.totalorder %s13, 0
      %p101 = por %p99, %p100
      %p102 = scmp.ne.s32.totalorder %s94, %s96
      %p103 = scmp.eq.s32.totalorder %s18, 1
      %p104 = por %p102, %p103
      %p105 = scmp.ne.s32.totalorder %s96, %s97
      %p106 = scmp.eq.s32.totalorder %s18, 0
      %p107 = por %p105, %p106
      %p108 = scmp.ne.s32.totalorder %s96, %s97
      %p109 = scmp.eq.s32.totalorder %s19, 1
      %p110 = por %p108, %p109
      %p112 = scmp.ne.s32.totalorder %s97, %s111
      %p113 = scmp.eq.s32.totalorder %s19, 0
      %p114 = por %p112, %p113
      %s115 = ssub.s32 %s13, %s20
      %p116 = scmp.eq.s32.totalorder %s115, 0
      %s118 = sadd.s32 %s117, 1
      %s119 = scalar_select %p116, %s117, %s118
      %p122 = pneg %p116
      %p123 = scmp.eq.s32.totalorder %s13, 1
      %p124 = por %p122, %p123
      %p125 = scmp.ne.s32.totalorder %s117, %s120
      %p126 = scmp.eq.s32.totalorder %s13, 0
      %p127 = por %p125, %p126
      %p128 = scmp.ne.s32.totalorder %s117, %s120
      %p129 = scmp.eq.s32.totalorder %s18, 1
      %p130 = por %p128, %p129
      %p131 = scmp.ne.s32.totalorder %s120, %s121
      %p132 = scmp.eq.s32.totalorder %s18, 0
      %p133 = por %p131, %p132
      %p134 = scmp.ne.s32.totalorder %s120, %s121
      %p135 = scmp.eq.s32.totalorder %s19, 1
      %p136 = por %p134, %p135
      %p138 = scmp.ne.s32.totalorder %s121, %s137
      %p139 = scmp.eq.s32.totalorder %s19, 0
      %p140 = por %p138, %p139
      %p141 = scmp.le.s32.totalorder 1, %s13
      %p142 = scmp.lt.s32.totalorder %s13, 3
      %p143 = pnand %p141, %p142
      %p144 = pneg %p143
      // Predicated region
      $region9: #{tpu_custom_call.1} parent=5 // pred_check
        _
      $region10: #{tpu_custom_call.1} parent=5 // pred_check_branch
        %146 = sbr.rel (%p143) target = $region12
      $region11: #{tpu_custom_call.1} parent=5 // pred_region
        %s147 = ssub.s32 %s13, 1
        // Predicated region
        $region13: #{tpu_custom_call.1} parent=11 // pred_check
          %p148 = pneg %p60
        $region14: #{tpu_custom_call.1} parent=11 // pred_check_branch
          %150 = sbr.rel (%p148) target = $region16
        $region15: #{tpu_custom_call.1} parent=11 // pred_region
          _
        $region16: #{tpu_custom_call.1} parent=11 // pred_fallthru
          _
        // Predicated region
        $region17: #{tpu_custom_call.1} parent=11 // pred_check
          %p151 = pneg %p107
        $region18: #{tpu_custom_call.1} parent=11 // pred_check_branch
          %153 = sbr.rel (%p151) target = $region20
        $region19: #{tpu_custom_call.1} parent=11 // pred_region
          _
        $region20: #{tpu_custom_call.1} parent=11 // pred_fallthru
          _
      $region12: #{tpu_custom_call.1} parent=5 // pred_fallthru
        _
      %p154 = scmp.lt.s32.totalorder %s13, 2
      // Predicated region
      $region21: #{tpu_custom_call.1} parent=5 // pred_check
        %p155 = pneg %p154
      $region22: #{tpu_custom_call.1} parent=5 // pred_check_branch
        %157 = sbr.rel (%p155) target = $region24
      $region23: #{tpu_custom_call.1} parent=5 // pred_region
        // Predicated region
        $region25: #{tpu_custom_call.1} parent=23 // pred_check
          %p158 = pneg %p33
        $region26: #{tpu_custom_call.1} parent=23 // pred_check_branch
          %160 = sbr.rel (%p158) target = $region28
        $region27: #{tpu_custom_call.1} parent=23 // pred_region
          %p161 = scmp.lt.s32.totalorder %s13, 1
          %s162 = scalar_select %p161, %s13, 1
          %s163 = smul.addr %s162, 2
          %s164 = scalar_lea.vmem %s0, %s163
        $region28: #{tpu_custom_call.1} parent=23 // pred_fallthru
          _
        // Predicated region
        $region29: #{tpu_custom_call.1} parent=23 // pred_check
          %p165 = pneg %p80
        $region30: #{tpu_custom_call.1} parent=23 // pred_check_branch
          %167 = sbr.rel (%p165) target = $region32
        $region31: #{tpu_custom_call.1} parent=23 // pred_region
          %p168 = scmp.lt.s32.totalorder %s13, 1
          %s169 = scalar_select %p168, %s13, 1
          %s170 = smul.addr %s169, 2
          %s171 = scalar_lea.vmem %s2, %s170
        $region32: #{tpu_custom_call.1} parent=23 // pred_fallthru
          _
      $region24: #{tpu_custom_call.1} parent=5 // pred_fallthru
        _
      %p172 = scmp.le.s32.totalorder 1, %s13
      %p173 = scmp.lt.s32.totalorder %s13, 3
      %p174 = pnand %p172, %p173
      %p175 = pneg %p174
      // Predicated region
      $region33: #{tpu_custom_call.1} parent=5 // pred_check
        _
      $region34: #{tpu_custom_call.1} parent=5 // pred_check_branch
        %177 = sbr.rel (%p174) target = $region36
      $region35: #{tpu_custom_call.1} parent=5 // pred_region
        %s178 = ssub.s32 %s13, 1
        %p179 = scmp.lt.s32.totalorder %s18, 1
        %s180 = scalar_select %p179, %s18, 1
        %s181 = smul.addr %s180, 2
        %s182 = scalar_lea.vmem %s0, %s181
        %p183 = pneg %p39
        %p184 = pneg %p36
        %p185 = pneg %p60
        %p186 = pneg %p57
        %p187 = scmp.lt.s32.totalorder %s18, 1
        %s188 = scalar_select %p187, %s18, 1
        %s189 = smul.addr %s188, 2
        %s190 = scalar_lea.vmem %s2, %s189
        %p191 = pneg %p86
        %p192 = pneg %p83
        %p193 = pneg %p107
        %p194 = pneg %p104
        %p195 = pneg %p133
        %p196 = pneg %p130
        %s197 = sand.u32 %s120, 1
        %s198 = scalar_lea.sflag [#allocation3], %s197
        %s199 = sand.u32 %s120, 1
        %s200 = scalar_lea.vmem [#allocation2], %s199
        %p201 = scmp.lt.s32.totalorder %s18, 1
        %s202 = scalar_select %p201, %s18, 1
        %s203 = smul.addr %s202, 2
        %s204 = scalar_lea.vmem %s0, %s203
        %p205 = scmp.lt.s32.totalorder %s18, 1
        %s206 = scalar_select %p205, %s18, 1
        %s207 = smul.addr %s206, 2
        %s208 = scalar_lea.vmem %s2, %s207
        %v209 = vld [vmem:[%s204] sm:$0x3]
        %v210 = vld [vmem:[%s208] sm:$0x3]
        %v211 = vlaneseq
        %v212 = vand.u32 %v211, 127
        %v213 = vld [vmem:[%s1] sm:$0x3]
        %v214 = vsub.f32 %v209, %v213
        %v215 = vmul.f32 %v214, %v214
        %v216 = vand.u32 2147483647, %v214
        %vm217 = vcmp.lt.f32.partialorder %v216, 1.0
        %v218 = vmul.f32 %v215, 0.5
        %v219 = vsub.f32 %v216, 0.5
        %v220 = vsel %vm217, %v218, %v219
        %v221 = vmul.f32 %v209, %v213
        %vm222 = vcmask 1041408
        %v223 = vsel %vm222, %v221, 0.0
        %224 = vadd.xlane.f32.xlu0 %v223
        %v225 = vpop.xlane.xlu0 %224
        %v226 = vsel %vm222, %v215, 0.0
        %227 = vadd.xlane.f32.xlu0 %v226
        %v228 = vpop.xlane.xlu0 %227
        %v229 = vrot.slane %v228, 4
        %v230 = vadd.f32 %v228, %v229
        %v231 = vrot.slane %v230, 2
        %v232 = vadd.f32 %v230, %v231
        %v233 = vrot.slane %v232, 1
        %v234 = vadd.f32 %v232, %v233
        %s235 = vtos %v234
        %v236 = vsel %vm222, %v220, 0.0
        %237 = vadd.xlane.f32.xlu0 %v236
        %v238 = vpop.xlane.xlu0 %237
        %v239 = vrot.slane %v238, 4
        %v240 = vadd.f32 %v238, %v239
        %v241 = vrot.slane %v240, 2
        %v242 = vadd.f32 %v240, %v241
        %v243 = vrot.slane %v242, 1
        %v244 = vadd.f32 %v242, %v243
        %s245 = vtos %v244
        %v246 = vmul.f32 %v225, %v210
        %v247 = vld [vmem:[%s3] sm:$0x3]
        %v248 = vmul.f32 %v246, %v247
        %vm249 = vcmask 1024
        %v250 = vsel %vm249, %v248, 0.0
        %251 = vadd.xlane.f32.xlu0 %v250
        %v252 = vpop.xlane.xlu0 %251
        %v253 = vrot.slane %v252, 4
        %v254 = vadd.f32 %v252, %v253
        %v255 = vrot.slane %v254, 2
        %v256 = vadd.f32 %v254, %v255
        %v257 = vrot.slane %v256, 1
        %v258 = vadd.f32 %v256, %v257
        %s259 = vtos %v258
        %s260 = ssub.f32 2.0, %s259
        %vm261 = vcmp.eq.s32.totalorder %v212, 0
        %v262 = vstv %s235
        %v263 = vsel %vm261, %v262, 0.0
        %vm264 = vcmp.eq.s32.totalorder %v212, 1
        %v265 = vstv %s245
        %v266 = vsel %vm264, %v265, 0.0
        %v267 = vadd.f32 %v263, %v266
        %vm268 = vcmp.eq.s32.totalorder %v212, 2
        %v269 = vstv %s260
        %v270 = vsel %vm268, %v269, 0.0
        %v271 = vadd.f32 %v267, %v270
        %272 = vst [vmem:[%s200] sm:$0x1] %v271
        %s273 = sand.u32 %s120, 1
        %s274 = scalar_lea.sflag [#allocation3], %s273
        %s275 = sand.u32 %s120, 1
        %s276 = scalar_lea.vmem [#allocation2], %s275
        // Predicated region
        $region37: #{tpu_custom_call.1} parent=35 // pred_check
          %p277 = pneg %p130
        $region38: #{tpu_custom_call.1} parent=35 // pred_check_branch
          %279 = sbr.rel (%p277) target = $region40
        $region39: #{tpu_custom_call.1} parent=35 // pred_region
          %s281 = ssub.s32 16, 16
          %282 = vsyncadd %s274, %s281
          %s283 = smul.addr %s18, 16
          %s284 = scalar_lea.hbm %s4, %s283
          %s286 = sshll.u32 %s276, 4
          %s287 = int_to_ptr.vmem [resolvable:$true] %s286
          %289 = dma.vmem_to_hbm [thread:$0]  %s287, 16, %s284, %s274
        $region40: #{tpu_custom_call.1} parent=35 // pred_fallthru
          _
      $region36: #{tpu_custom_call.1} parent=5 // pred_fallthru
        _
      %p290 = scmp.le.s32.totalorder 2, %s13
      // Predicated region
      $region41: #{tpu_custom_call.1} parent=5 // pred_check
        %p291 = pneg %p290
      $region42: #{tpu_custom_call.1} parent=5 // pred_check_branch
        %293 = sbr.rel (%p291) target = $region44
      $region43: #{tpu_custom_call.1} parent=5 // pred_region
        %s294 = ssub.s32 %s13, 2
        // Predicated region
        $region45: #{tpu_custom_call.1} parent=43 // pred_check
          %p295 = pneg %p136
        $region46: #{tpu_custom_call.1} parent=43 // pred_check_branch
          %297 = sbr.rel (%p295) target = $region48
        $region47: #{tpu_custom_call.1} parent=43 // pred_region
          %s298 = sand.u32 %s121, 1
          %s299 = scalar_lea.sflag [#allocation3], %s298
          %s300 = sand.u32 %s121, 1
          %s301 = scalar_lea.vmem [#allocation2], %s300
          %302 = dma.done %s299, 16
        $region48: #{tpu_custom_call.1} parent=43 // pred_fallthru
          _
      $region44: #{tpu_custom_call.1} parent=5 // pred_fallthru
        _
    $region6: #{tpu_custom_call.1} parent=1 // loop_footer
      %s17 = sadd.s32 1, %s13
    $region7: #{tpu_custom_call.1} parent=1 // loop_footer_branch
      %12 = sbr.rel target = $region3
    $region8: #{tpu_custom_call.1} parent=1 // loop_exit
      _
    %303 = vsyncpa [#allocation3], 1
    %s304 = scalar_lea.sflag [#allocation3], 1
    %305 = vsyncpa %s304, 1

</llo_original>
